<compile_context>
chip_gen: v7x
topology: tpu7x:2x2x1
jax: 0.10.0
libtpu: 0.0.40
codegen_flags: <defaults>
</compile_context>

<pallas_src>
import jax
import jax.numpy as jnp
import numpy as np
from jax.experimental import pallas as pl
from jax.experimental.pallas import tpu as pltpu


# ------------------------------- fused kernel ------------------------------- #

def _make_fused_kernel(H, W):
    HW = H * W
    taps = [(oy, ox) for oy in (-1, 0, 1) for ox in (-1, 0, 1)]

    def kernel(mask_ref, x_ref, w0_ref, b0_ref, w1_ref, b1_ref, w2_ref, b2_ref,
               o_ref):
        # mask_ref: (9, 1, HW)  f32 tap-validity masks (1 = inside image)
        # x_ref   : (1, Cin, HW)
        # w0_ref  : (Cpad, Cin)      b0_ref: (Cpad, 1)
        # w1_ref  : (Cpad, 9*Cpad)   b1_ref: (Cpad, 1)
        # w2_ref  : (Cpad, 9*Cpad)   b2_ref: (Cpad, 1)
        # o_ref   : (1, Cpad, HW)
        x = x_ref[0]                                           # (Cin, HW)

        def conv_bn_relu(w_ref_, b_ref_, rhs):
            acc = jnp.dot(w_ref_[...], rhs, preferred_element_type=jnp.float32)
            return jnp.maximum(acc + b_ref_[...], 0.0)

        def im2col(a):
            # (Cpad, HW) -> (9*Cpad, HW): lane-rolled + boundary-masked taps.
            cols = []
            for t, (oy, ox) in enumerate(taps):
                s = oy * W + ox
                shifted = a if s == 0 else pltpu.roll(a, shift=(-s) % HW, axis=1)
                cols.append(shifted * mask_ref[t])             # (Cpad, HW)
            return jnp.concatenate(cols, axis=0)               # (9*Cpad, HW)

        # stage 0: 1x1 conv -> channel rows [0, C1)
        out = conv_bn_relu(w0_ref, b0_ref, x)
        # stage 1: 3x3 conv on out1 -> rows [C1, C1+C2)  (disjoint rows: add)
        out = out + conv_bn_relu(w1_ref, b1_ref, im2col(out))
        # stage 2: 3x3 conv on out2 -> rows [C1+C2, Ctot)
        out = out + conv_bn_relu(w2_ref, b2_ref, im2col(out))

        o_ref[0] = out.astype(o_ref.dtype)

    return kernel


# ------------------------------ host-side prep ------------------------------ #

def _tap_masks(H, W):
    """(9, 1, H*W) f32 validity masks for the 9 conv taps over the flat lane axis."""
    hh, ww = np.meshgrid(np.arange(H), np.arange(W), indexing="ij")
    hh, ww = hh.reshape(-1), ww.reshape(-1)
    m = []
    for oy in (-1, 0, 1):
        for ox in (-1, 0, 1):
            m.append(((hh + oy >= 0) & (hh + oy < H) &
                      (ww + ox >= 0) & (ww + ox < W)).astype(np.float32))
    return jnp.asarray(np.stack(m, 0)[:, None, :])


def _pack_params(p, Cpad):
    """Fold BN scale into conv weights and place each stage at its final channel rows."""
    w0, s0, b0 = p["w0"], p["s0"], p["b0"]     # (C1, Cin, 1, 1)
    w1, s1, b1 = p["w1"], p["s1"], p["b1"]     # (C2, C1, 3, 3)
    w2, s2, b2 = p["w2"], p["s2"], p["b2"]     # (C3, C2, 3, 3)
    C1, Cin = w0.shape[0], w0.shape[1]
    C2, C3 = w1.shape[0], w2.shape[0]
    f32 = jnp.float32

    w0f = (w0[:, :, 0, 0] * s0[:, None]).astype(f32)                     # (C1, Cin)
    W0 = jnp.zeros((Cpad, Cin), f32).at[:C1].set(w0f)
    B0 = jnp.zeros((Cpad, 1), f32).at[:C1, 0].set(b0.astype(f32))

    def pack3x3(w, s, b, in_off, in_c, out_off, out_c):
        wf = (w * s[:, None, None, None]).astype(f32)                    # OIHW
        wf = jnp.transpose(wf, (0, 2, 3, 1)).reshape(out_c, 9, in_c)     # (O, tap, I)
        cols = jnp.zeros((out_c, 9, Cpad), f32).at[:, :, in_off:in_off + in_c].set(wf)
        Wp = jnp.zeros((Cpad, 9 * Cpad), f32).at[out_off:out_off + out_c].set(
            cols.reshape(out_c, 9 * Cpad))
        Bp = jnp.zeros((Cpad, 1), f32).at[out_off:out_off + out_c, 0].set(b.astype(f32))
        return Wp, Bp

    W1, B1 = pack3x3(w1, s1, b1, in_off=0, in_c=C1, out_off=C1, out_c=C2)
    W2, B2 = pack3x3(w2, s2, b2, in_off=C1, in_c=C2, out_off=C1 + C2, out_c=C3)
    return W0, B0, W1, B1, W2, B2


# --------------------------------- wrapper ---------------------------------- #

def cat_bottleneck_forward(x_nchw, params):
    """CatBottleneck(in_planes, out_planes, block_num=3, stride=1).forward."""
    # TODO(synk): stride==2 branch (depthwise stride-2 avd_layer + AvgPool2d skip) is not
    #             exercised by the default config and is not implemented here.
    N, Cin, H, W = x_nchw.shape
    assert params["w1"].shape[2:] == (3, 3) and params["w2"].shape[2:] == (3, 3)
    C1, C2, C3 = params["w0"].shape[0], params["w1"].shape[0], params["w2"].shape[0]
    Ctot = C1 + C2 + C3
    Cpad = ((Ctot + 7) // 8) * 8                      # sublane-tile-aligned channel axis
    HW = H * W

    W0, B0, W1, B1, W2, B2 = _pack_params(params, Cpad)
    masks = _tap_masks(H, W)
    x_flat = x_nchw.reshape(N, Cin, HW)               # contiguous reshape, no transpose

    # TODO(synk): at production STDCNet sizes add an H-tile grid axis (1-row halo) and set
    #             vmem_limit_bytes; a full image per grid step is fine at these shapes.
    out = pl.pallas_call(
        _make_fused_kernel(H, W),
        out_shape=jax.ShapeDtypeStruct((N, Cpad, HW), x_nchw.dtype),
        grid=(N,),
        in_specs=[
            pl.BlockSpec((9, 1, HW), lambda n: (0, 0, 0)),
            pl.BlockSpec((1, Cin, HW), lambda n: (n, 0, 0)),
            pl.BlockSpec((Cpad, Cin), lambda n: (0, 0)),
            pl.BlockSpec((Cpad, 1), lambda n: (0, 0)),
            pl.BlockSpec((Cpad, 9 * Cpad), lambda n: (0, 0)),
            pl.BlockSpec((Cpad, 1), lambda n: (0, 0)),
            pl.BlockSpec((Cpad, 9 * Cpad), lambda n: (0, 0)),
            pl.BlockSpec((Cpad, 1), lambda n: (0, 0)),
        ],
        out_specs=pl.BlockSpec((1, Cpad, HW), lambda n: (n, 0, 0)),
        compiler_params=pltpu.CompilerParams(dimension_semantics=("parallel",)),
    )(masks, x_flat, W0, B0, W1, B1, W2, B2)
    return out[:, :Ctot, :].reshape(N, Ctot, H, W)


# ----------------------------- pure-JAX reference ---------------------------- #

def cat_bottleneck_ref(x_nchw, p):
    def cbr(x, w, s, b):
        y = jax.lax.conv_general_dilated(
            x, w, window_strides=(1, 1), padding="SAME",
            dimension_numbers=("NCHW", "OIHW", "NCHW"))
        return jnp.maximum(y * s[None, :, None, None] + b[None, :, None, None], 0.0)
    out1 = cbr(x_nchw, p["w0"], p["s0"], p["b0"])
    out2 = cbr(out1, p["w1"], p["s1"], p["b1"])
    out3 = cbr(out2, p["w2"], p["s2"], p["b2"])
    return jnp.concatenate([out1, out2, out3], axis=1)


# ----------------------------------- main ------------------------------------ #

def _bn_fold(kg, kb, km, kv, c, eps=1e-5):
    gamma = 1.0 + 0.1 * jax.random.normal(kg, (c,), jnp.float32)
    beta = 0.1 * jax.random.normal(kb, (c,), jnp.float32)
    mean = 0.1 * jax.random.normal(km, (c,), jnp.float32)
    var = jnp.abs(jax.random.normal(kv, (c,), jnp.float32)) + 0.5
    scale = gamma / jnp.sqrt(var + eps)
    bias = beta - mean * scale
    return scale, bias


if __name__ == "__main__":
    N, in_planes, H, W = 2, 4, 16, 16
    out_planes = 8
    c_half, c_quart = out_planes // 2, out_planes // 4          # 4, 2

    ks = jax.random.split(jax.random.PRNGKey(0), 16)
    # conv0: 1x1 in_planes -> out//2 ; conv1: 3x3 out//2 -> out//4 ; conv2: 3x3 out//4 -> out//4
    w0 = 0.2 * jax.random.normal(ks[0], (c_half, in_planes, 1, 1), jnp.float32)
    s0, b0 = _bn_fold(ks[1], ks[2], ks[3], ks[4], c_half)
    w1 = 0.2 * jax.random.normal(ks[5], (c_quart, c_half, 3, 3), jnp.float32)
    s1, b1 = _bn_fold(ks[6], ks[7], ks[8], ks[9], c_quart)
    w2 = 0.2 * jax.random.normal(ks[10], (c_quart, c_quart, 3, 3), jnp.float32)
    s2, b2 = _bn_fold(ks[11], ks[12], ks[13], ks[14], c_quart)

    params = dict(w0=w0, s0=s0, b0=b0, w1=w1, s1=s1, b1=b1, w2=w2, s2=s2, b2=b2)
    x = jax.random.normal(ks[15], (N, in_planes, H, W), jnp.float32)     # NCHW

    out = jax.block_until_ready(cat_bottleneck_forward(x, params))
    assert out.shape == (N, out_planes, H, W), out.shape

    ref = jax.block_until_ready(cat_bottleneck_ref(x, params))
    np.testing.assert_allclose(np.asarray(out), np.asarray(ref),
                               rtol=1e-4, atol=1e-4)
    print("KERNEL_OK")
</pallas_src>

<mosaic_0001>
module attributes {stable_mosaic.version = 11 : i64} {
  func.func @kernel(%arg0: i32, %arg1: memref<9x1x256xf32, #tpu.memory_space<vmem>>, %arg2: memref<1x4x256xf32, #tpu.memory_space<vmem>>, %arg3: memref<8x4xf32, #tpu.memory_space<vmem>>, %arg4: memref<8x1xf32, #tpu.memory_space<vmem>>, %arg5: memref<8x72xf32, #tpu.memory_space<vmem>>, %arg6: memref<8x1xf32, #tpu.memory_space<vmem>>, %arg7: memref<8x72xf32, #tpu.memory_space<vmem>>, %arg8: memref<8x1xf32, #tpu.memory_space<vmem>>, %arg9: memref<1x8x256xf32, #tpu.memory_space<vmem>>) attributes {dimension_semantics = [#tpu.dimension_semantics<parallel>], iteration_bounds = array<i64: 2>, scalar_prefetch = 0 : i64, scratch_operands = 0 : i64, tpu.core_type = #tpu.core_type<tc>, window_params = [{pipeline_mode = #tpu.pipeline_mode<synchronous>, transform_indices = @transform_0, window_bounds = array<i64: 9, 1, 256>}, {transform_indices = @transform_1, window_bounds = array<i64: 1, 4, 256>}, {pipeline_mode = #tpu.pipeline_mode<synchronous>, transform_indices = @transform_2, window_bounds = array<i64: 8, 4>}, {pipeline_mode = #tpu.pipeline_mode<synchronous>, transform_indices = @transform_3, window_bounds = array<i64: 8, 1>}, {pipeline_mode = #tpu.pipeline_mode<synchronous>, transform_indices = @transform_4, window_bounds = array<i64: 8, 72>}, {pipeline_mode = #tpu.pipeline_mode<synchronous>, transform_indices = @transform_5, window_bounds = array<i64: 8, 1>}, {pipeline_mode = #tpu.pipeline_mode<synchronous>, transform_indices = @transform_6, window_bounds = array<i64: 8, 72>}, {pipeline_mode = #tpu.pipeline_mode<synchronous>, transform_indices = @transform_7, window_bounds = array<i64: 8, 1>}, {transform_indices = @transform_8, window_bounds = array<i64: 1, 8, 256>}]} {
    %c0 = arith.constant 0 : index
    %c0_0 = arith.constant 0 : index
    %c0_1 = arith.constant 0 : index
    %0 = vector.load %arg2[%c0, %c0_0, %c0_1] : memref<1x4x256xf32, #tpu.memory_space<vmem>>, vector<1x4x256xf32>
    %1 = vector.shape_cast %0 : vector<1x4x256xf32> to vector<4x256xf32>
    %c0_2 = arith.constant 0 : index
    %c0_3 = arith.constant 0 : index
    %2 = vector.load %arg3[%c0_2, %c0_3] : memref<8x4xf32, #tpu.memory_space<vmem>>, vector<8x4xf32>
    %cst = arith.constant dense<0.000000e+00> : vector<8x256xf32>
    %3 = tpu.matmul %2, %1, %cst {dimension_numbers = #tpu.dot_dimension_numbers<[1], [0], [0], [1], [0, 0, 1, 1], [], []>} : vector<8x4xf32>, vector<4x256xf32>, vector<8x256xf32> -> vector<8x256xf32>
    %c0_4 = arith.constant 0 : index
    %c0_5 = arith.constant 0 : index
    %4 = vector.load %arg4[%c0_4, %c0_5] : memref<8x1xf32, #tpu.memory_space<vmem>>, vector<8x1xf32>
    %5 = vector.broadcast %4 : vector<8x1xf32> to vector<8x256xf32>
    %6 = arith.addf %3, %5 : vector<8x256xf32>
    %cst_6 = arith.constant 0.000000e+00 : f32
    %7 = vector.broadcast %cst_6 : f32 to vector<8x256xf32>
    %8 = arith.maximumf %6, %7 : vector<8x256xf32>
    %c17_i32 = arith.constant 17 : i32
    %9 = tpu.dynamic_rotate %8 by %c17_i32 dim 1 : vector<8x256xf32>, i32 -> vector<8x256xf32>
    %c0_7 = arith.constant 0 : index
    %c0_8 = arith.constant 0 : index
    %c0_9 = arith.constant 0 : index
    %10 = vector.load %arg1[%c0_7, %c0_8, %c0_9] : memref<9x1x256xf32, #tpu.memory_space<vmem>>, vector<1x1x256xf32>
    %11 = vector.shape_cast %10 : vector<1x1x256xf32> to vector<1x256xf32>
    %12 = vector.broadcast %11 : vector<1x256xf32> to vector<8x256xf32>
    %13 = arith.mulf %9, %12 : vector<8x256xf32>
    %c16_i32 = arith.constant 16 : i32
    %14 = tpu.dynamic_rotate %8 by %c16_i32 dim 1 : vector<8x256xf32>, i32 -> vector<8x256xf32>
    %c1 = arith.constant 1 : index
    %c0_10 = arith.constant 0 : index
    %c0_11 = arith.constant 0 : index
    %15 = vector.load %arg1[%c1, %c0_10, %c0_11] : memref<9x1x256xf32, #tpu.memory_space<vmem>>, vector<1x1x256xf32>
    %16 = vector.shape_cast %15 : vector<1x1x256xf32> to vector<1x256xf32>
    %17 = vector.broadcast %16 : vector<1x256xf32> to vector<8x256xf32>
    %18 = arith.mulf %14, %17 : vector<8x256xf32>
    %c15_i32 = arith.constant 15 : i32
    %19 = tpu.dynamic_rotate %8 by %c15_i32 dim 1 : vector<8x256xf32>, i32 -> vector<8x256xf32>
    %c2 = arith.constant 2 : index
    %c0_12 = arith.constant 0 : index
    %c0_13 = arith.constant 0 : index
    %20 = vector.load %arg1[%c2, %c0_12, %c0_13] : memref<9x1x256xf32, #tpu.memory_space<vmem>>, vector<1x1x256xf32>
    %21 = vector.shape_cast %20 : vector<1x1x256xf32> to vector<1x256xf32>
    %22 = vector.broadcast %21 : vector<1x256xf32> to vector<8x256xf32>
    %23 = arith.mulf %19, %22 : vector<8x256xf32>
    %c1_i32 = arith.constant 1 : i32
    %24 = tpu.dynamic_rotate %8 by %c1_i32 dim 1 : vector<8x256xf32>, i32 -> vector<8x256xf32>
    %c3 = arith.constant 3 : index
    %c0_14 = arith.constant 0 : index
    %c0_15 = arith.constant 0 : index
    %25 = vector.load %arg1[%c3, %c0_14, %c0_15] : memref<9x1x256xf32, #tpu.memory_space<vmem>>, vector<1x1x256xf32>
    %26 = vector.shape_cast %25 : vector<1x1x256xf32> to vector<1x256xf32>
    %27 = vector.broadcast %26 : vector<1x256xf32> to vector<8x256xf32>
    %28 = arith.mulf %24, %27 : vector<8x256xf32>
    %c4 = arith.constant 4 : index
    %c0_16 = arith.constant 0 : index
    %c0_17 = arith.constant 0 : index
    %29 = vector.load %arg1[%c4, %c0_16, %c0_17] : memref<9x1x256xf32, #tpu.memory_space<vmem>>, vector<1x1x256xf32>
    %30 = vector.shape_cast %29 : vector<1x1x256xf32> to vector<1x256xf32>
    %31 = vector.broadcast %30 : vector<1x256xf32> to vector<8x256xf32>
    %32 = arith.mulf %8, %31 : vector<8x256xf32>
    %c255_i32 = arith.constant 255 : i32
    %33 = tpu.dynamic_rotate %8 by %c255_i32 dim 1 : vector<8x256xf32>, i32 -> vector<8x256xf32>
    %c5 = arith.constant 5 : index
    %c0_18 = arith.constant 0 : index
    %c0_19 = arith.constant 0 : index
    %34 = vector.load %arg1[%c5, %c0_18, %c0_19] : memref<9x1x256xf32, #tpu.memory_space<vmem>>, vector<1x1x256xf32>
    %35 = vector.shape_cast %34 : vector<1x1x256xf32> to vector<1x256xf32>
    %36 = vector.broadcast %35 : vector<1x256xf32> to vector<8x256xf32>
    %37 = arith.mulf %33, %36 : vector<8x256xf32>
    %c241_i32 = arith.constant 241 : i32
    %38 = tpu.dynamic_rotate %8 by %c241_i32 dim 1 : vector<8x256xf32>, i32 -> vector<8x256xf32>
    %c6 = arith.constant 6 : index
    %c0_20 = arith.constant 0 : index
    %c0_21 = arith.constant 0 : index
    %39 = vector.load %arg1[%c6, %c0_20, %c0_21] : memref<9x1x256xf32, #tpu.memory_space<vmem>>, vector<1x1x256xf32>
    %40 = vector.shape_cast %39 : vector<1x1x256xf32> to vector<1x256xf32>
    %41 = vector.broadcast %40 : vector<1x256xf32> to vector<8x256xf32>
    %42 = arith.mulf %38, %41 : vector<8x256xf32>
    %c240_i32 = arith.constant 240 : i32
    %43 = tpu.dynamic_rotate %8 by %c240_i32 dim 1 : vector<8x256xf32>, i32 -> vector<8x256xf32>
    %c7 = arith.constant 7 : index
    %c0_22 = arith.constant 0 : index
    %c0_23 = arith.constant 0 : index
    %44 = vector.load %arg1[%c7, %c0_22, %c0_23] : memref<9x1x256xf32, #tpu.memory_space<vmem>>, vector<1x1x256xf32>
    %45 = vector.shape_cast %44 : vector<1x1x256xf32> to vector<1x256xf32>
    %46 = vector.broadcast %45 : vector<1x256xf32> to vector<8x256xf32>
    %47 = arith.mulf %43, %46 : vector<8x256xf32>
    %c239_i32 = arith.constant 239 : i32
    %48 = tpu.dynamic_rotate %8 by %c239_i32 dim 1 : vector<8x256xf32>, i32 -> vector<8x256xf32>
    %c8 = arith.constant 8 : index
    %c0_24 = arith.constant 0 : index
    %c0_25 = arith.constant 0 : index
    %49 = vector.load %arg1[%c8, %c0_24, %c0_25] : memref<9x1x256xf32, #tpu.memory_space<vmem>>, vector<1x1x256xf32>
    %50 = vector.shape_cast %49 : vector<1x1x256xf32> to vector<1x256xf32>
    %51 = vector.broadcast %50 : vector<1x256xf32> to vector<8x256xf32>
    %52 = arith.mulf %48, %51 : vector<8x256xf32>
    %53 = tpu.concatenate %13, %18, %23, %28, %32, %37, %42, %47, %52 in 0 : vector<8x256xf32>, vector<8x256xf32>, vector<8x256xf32>, vector<8x256xf32>, vector<8x256xf32>, vector<8x256xf32>, vector<8x256xf32>, vector<8x256xf32>, vector<8x256xf32> -> vector<72x256xf32>
    %c0_26 = arith.constant 0 : index
    %c0_27 = arith.constant 0 : index
    %54 = vector.load %arg5[%c0_26, %c0_27] : memref<8x72xf32, #tpu.memory_space<vmem>>, vector<8x72xf32>
    %cst_28 = arith.constant dense<0.000000e+00> : vector<8x256xf32>
    %55 = tpu.matmul %54, %53, %cst_28 {dimension_numbers = #tpu.dot_dimension_numbers<[1], [0], [0], [1], [0, 0, 1, 1], [], []>} : vector<8x72xf32>, vector<72x256xf32>, vector<8x256xf32> -> vector<8x256xf32>
    %c0_29 = arith.constant 0 : index
    %c0_30 = arith.constant 0 : index
    %56 = vector.load %arg6[%c0_29, %c0_30] : memref<8x1xf32, #tpu.memory_space<vmem>>, vector<8x1xf32>
    %57 = vector.broadcast %56 : vector<8x1xf32> to vector<8x256xf32>
    %58 = arith.addf %55, %57 : vector<8x256xf32>
    %cst_31 = arith.constant 0.000000e+00 : f32
    %59 = vector.broadcast %cst_31 : f32 to vector<8x256xf32>
    %60 = arith.maximumf %58, %59 : vector<8x256xf32>
    %61 = arith.addf %8, %60 : vector<8x256xf32>
    %c17_i32_32 = arith.constant 17 : i32
    %62 = tpu.dynamic_rotate %61 by %c17_i32_32 dim 1 : vector<8x256xf32>, i32 -> vector<8x256xf32>
    %c0_33 = arith.constant 0 : index
    %c0_34 = arith.constant 0 : index
    %c0_35 = arith.constant 0 : index
    %63 = vector.load %arg1[%c0_33, %c0_34, %c0_35] : memref<9x1x256xf32, #tpu.memory_space<vmem>>, vector<1x1x256xf32>
    %64 = vector.shape_cast %63 : vector<1x1x256xf32> to vector<1x256xf32>
    %65 = vector.broadcast %64 : vector<1x256xf32> to vector<8x256xf32>
    %66 = arith.mulf %62, %65 : vector<8x256xf32>
    %c16_i32_36 = arith.constant 16 : i32
    %67 = tpu.dynamic_rotate %61 by %c16_i32_36 dim 1 : vector<8x256xf32>, i32 -> vector<8x256xf32>
    %c1_37 = arith.constant 1 : index
    %c0_38 = arith.constant 0 : index
    %c0_39 = arith.constant 0 : index
    %68 = vector.load %arg1[%c1_37, %c0_38, %c0_39] : memref<9x1x256xf32, #tpu.memory_space<vmem>>, vector<1x1x256xf32>
    %69 = vector.shape_cast %68 : vector<1x1x256xf32> to vector<1x256xf32>
    %70 = vector.broadcast %69 : vector<1x256xf32> to vector<8x256xf32>
    %71 = arith.mulf %67, %70 : vector<8x256xf32>
    %c15_i32_40 = arith.constant 15 : i32
    %72 = tpu.dynamic_rotate %61 by %c15_i32_40 dim 1 : vector<8x256xf32>, i32 -> vector<8x256xf32>
    %c2_41 = arith.constant 2 : index
    %c0_42 = arith.constant 0 : index
    %c0_43 = arith.constant 0 : index
    %73 = vector.load %arg1[%c2_41, %c0_42, %c0_43] : memref<9x1x256xf32, #tpu.memory_space<vmem>>, vector<1x1x256xf32>
    %74 = vector.shape_cast %73 : vector<1x1x256xf32> to vector<1x256xf32>
    %75 = vector.broadcast %74 : vector<1x256xf32> to vector<8x256xf32>
    %76 = arith.mulf %72, %75 : vector<8x256xf32>
    %c1_i32_44 = arith.constant 1 : i32
    %77 = tpu.dynamic_rotate %61 by %c1_i32_44 dim 1 : vector<8x256xf32>, i32 -> vector<8x256xf32>
    %c3_45 = arith.constant 3 : index
    %c0_46 = arith.constant 0 : index
    %c0_47 = arith.constant 0 : index
    %78 = vector.load %arg1[%c3_45, %c0_46, %c0_47] : memref<9x1x256xf32, #tpu.memory_space<vmem>>, vector<1x1x256xf32>
    %79 = vector.shape_cast %78 : vector<1x1x256xf32> to vector<1x256xf32>
    %80 = vector.broadcast %79 : vector<1x256xf32> to vector<8x256xf32>
    %81 = arith.mulf %77, %80 : vector<8x256xf32>
    %c4_48 = arith.constant 4 : index
    %c0_49 = arith.constant 0 : index
    %c0_50 = arith.constant 0 : index
    %82 = vector.load %arg1[%c4_48, %c0_49, %c0_50] : memref<9x1x256xf32, #tpu.memory_space<vmem>>, vector<1x1x256xf32>
    %83 = vector.shape_cast %82 : vector<1x1x256xf32> to vector<1x256xf32>
    %84 = vector.broadcast %83 : vector<1x256xf32> to vector<8x256xf32>
    %85 = arith.mulf %61, %84 : vector<8x256xf32>
    %c255_i32_51 = arith.constant 255 : i32
    %86 = tpu.dynamic_rotate %61 by %c255_i32_51 dim 1 : vector<8x256xf32>, i32 -> vector<8x256xf32>
    %c5_52 = arith.constant 5 : index
    %c0_53 = arith.constant 0 : index
    %c0_54 = arith.constant 0 : index
    %87 = vector.load %arg1[%c5_52, %c0_53, %c0_54] : memref<9x1x256xf32, #tpu.memory_space<vmem>>, vector<1x1x256xf32>
    %88 = vector.shape_cast %87 : vector<1x1x256xf32> to vector<1x256xf32>
    %89 = vector.broadcast %88 : vector<1x256xf32> to vector<8x256xf32>
    %90 = arith.mulf %86, %89 : vector<8x256xf32>
    %c241_i32_55 = arith.constant 241 : i32
    %91 = tpu.dynamic_rotate %61 by %c241_i32_55 dim 1 : vector<8x256xf32>, i32 -> vector<8x256xf32>
    %c6_56 = arith.constant 6 : index
    %c0_57 = arith.constant 0 : index
    %c0_58 = arith.constant 0 : index
    %92 = vector.load %arg1[%c6_56, %c0_57, %c0_58] : memref<9x1x256xf32, #tpu.memory_space<vmem>>, vector<1x1x256xf32>
    %93 = vector.shape_cast %92 : vector<1x1x256xf32> to vector<1x256xf32>
    %94 = vector.broadcast %93 : vector<1x256xf32> to vector<8x256xf32>
    %95 = arith.mulf %91, %94 : vector<8x256xf32>
    %c240_i32_59 = arith.constant 240 : i32
    %96 = tpu.dynamic_rotate %61 by %c240_i32_59 dim 1 : vector<8x256xf32>, i32 -> vector<8x256xf32>
    %c7_60 = arith.constant 7 : index
    %c0_61 = arith.constant 0 : index
    %c0_62 = arith.constant 0 : index
    %97 = vector.load %arg1[%c7_60, %c0_61, %c0_62] : memref<9x1x256xf32, #tpu.memory_space<vmem>>, vector<1x1x256xf32>
    %98 = vector.shape_cast %97 : vector<1x1x256xf32> to vector<1x256xf32>
    %99 = vector.broadcast %98 : vector<1x256xf32> to vector<8x256xf32>
    %100 = arith.mulf %96, %99 : vector<8x256xf32>
    %c239_i32_63 = arith.constant 239 : i32
    %101 = tpu.dynamic_rotate %61 by %c239_i32_63 dim 1 : vector<8x256xf32>, i32 -> vector<8x256xf32>
    %c8_64 = arith.constant 8 : index
    %c0_65 = arith.constant 0 : index
    %c0_66 = arith.constant 0 : index
    %102 = vector.load %arg1[%c8_64, %c0_65, %c0_66] : memref<9x1x256xf32, #tpu.memory_space<vmem>>, vector<1x1x256xf32>
    %103 = vector.shape_cast %102 : vector<1x1x256xf32> to vector<1x256xf32>
    %104 = vector.broadcast %103 : vector<1x256xf32> to vector<8x256xf32>
    %105 = arith.mulf %101, %104 : vector<8x256xf32>
    %106 = tpu.concatenate %66, %71, %76, %81, %85, %90, %95, %100, %105 in 0 : vector<8x256xf32>, vector<8x256xf32>, vector<8x256xf32>, vector<8x256xf32>, vector<8x256xf32>, vector<8x256xf32>, vector<8x256xf32>, vector<8x256xf32>, vector<8x256xf32> -> vector<72x256xf32>
    %c0_67 = arith.constant 0 : index
    %c0_68 = arith.constant 0 : index
    %107 = vector.load %arg7[%c0_67, %c0_68] : memref<8x72xf32, #tpu.memory_space<vmem>>, vector<8x72xf32>
    %cst_69 = arith.constant dense<0.000000e+00> : vector<8x256xf32>
    %108 = tpu.matmul %107, %106, %cst_69 {dimension_numbers = #tpu.dot_dimension_numbers<[1], [0], [0], [1], [0, 0, 1, 1], [], []>} : vector<8x72xf32>, vector<72x256xf32>, vector<8x256xf32> -> vector<8x256xf32>
    %c0_70 = arith.constant 0 : index
    %c0_71 = arith.constant 0 : index
    %109 = vector.load %arg8[%c0_70, %c0_71] : memref<8x1xf32, #tpu.memory_space<vmem>>, vector<8x1xf32>
    %110 = vector.broadcast %109 : vector<8x1xf32> to vector<8x256xf32>
    %111 = arith.addf %108, %110 : vector<8x256xf32>
    %cst_72 = arith.constant 0.000000e+00 : f32
    %112 = vector.broadcast %cst_72 : f32 to vector<8x256xf32>
    %113 = arith.maximumf %111, %112 : vector<8x256xf32>
    %114 = arith.addf %61, %113 : vector<8x256xf32>
    %c0_73 = arith.constant 0 : index
    %c0_74 = arith.constant 0 : index
    %c0_75 = arith.constant 0 : index
    %115 = vector.load %arg9[%c0_73, %c0_74, %c0_75] : memref<1x8x256xf32, #tpu.memory_space<vmem>>, vector<1x8x256xf32>
    %116 = vector.shape_cast %115 : vector<1x8x256xf32> to vector<8x256xf32>
    %117 = vector.shape_cast %114 : vector<8x256xf32> to vector<1x8x256xf32>
    tpu.vector_store %arg9[%c0_73, %c0_74, %c0_75], %117 {strides = array<i32>} : memref<1x8x256xf32, #tpu.memory_space<vmem>>, vector<1x8x256xf32>,
    return
  }
  func.func @transform_0(%arg0: i32) -> (i32, i32, i32) {
    %c0_i32 = arith.constant 0 : i32
    %c0_i32_0 = arith.constant 0 : i32
    %c0_i32_1 = arith.constant 0 : i32
    %c0_i32_2 = arith.constant 0 : i32
    return %c0_i32, %c0_i32_0, %c0_i32_1 : i32, i32, i32
  }
  func.func @transform_1(%arg0: i32) -> (i32, i32, i32) {
    %c0_i32 = arith.constant 0 : i32
    %c0_i32_0 = arith.constant 0 : i32
    %c0_i32_1 = arith.constant 0 : i32
    return %arg0, %c0_i32, %c0_i32_0 : i32, i32, i32
  }
  func.func @transform_2(%arg0: i32) -> (i32, i32) {
    %c0_i32 = arith.constant 0 : i32
    %c0_i32_0 = arith.constant 0 : i32
    %c0_i32_1 = arith.constant 0 : i32
    return %c0_i32, %c0_i32_0 : i32, i32
  }
  func.func @transform_3(%arg0: i32) -> (i32, i32) {
    %c0_i32 = arith.constant 0 : i32
    %c0_i32_0 = arith.constant 0 : i32
    %c0_i32_1 = arith.constant 0 : i32
    return %c0_i32, %c0_i32_0 : i32, i32
  }
  func.func @transform_4(%arg0: i32) -> (i32, i32) {
    %c0_i32 = arith.constant 0 : i32
    %c0_i32_0 = arith.constant 0 : i32
    %c0_i32_1 = arith.constant 0 : i32
    return %c0_i32, %c0_i32_0 : i32, i32
  }
  func.func @transform_5(%arg0: i32) -> (i32, i32) {
    %c0_i32 = arith.constant 0 : i32
    %c0_i32_0 = arith.constant 0 : i32
    %c0_i32_1 = arith.constant 0 : i32
    return %c0_i32, %c0_i32_0 : i32, i32
  }
  func.func @transform_6(%arg0: i32) -> (i32, i32) {
    %c0_i32 = arith.constant 0 : i32
    %c0_i32_0 = arith.constant 0 : i32
    %c0_i32_1 = arith.constant 0 : i32
    return %c0_i32, %c0_i32_0 : i32, i32
  }
  func.func @transform_7(%arg0: i32) -> (i32, i32) {
    %c0_i32 = arith.constant 0 : i32
    %c0_i32_0 = arith.constant 0 : i32
    %c0_i32_1 = arith.constant 0 : i32
    return %c0_i32, %c0_i32_0 : i32, i32
  }
  func.func @transform_8(%arg0: i32) -> (i32, i32, i32) {
    %c0_i32 = arith.constant 0 : i32
    %c0_i32_0 = arith.constant 0 : i32
    %c0_i32_1 = arith.constant 0 : i32
    return %arg0, %c0_i32, %c0_i32_0 : i32, i32, i32
  }
}

</mosaic_0001>

<llo_original>
// kernel: tpu_custom_call.1
$region0: #{tpu_custom_call.1}
  #allocation0 [shape = 'u32[]', space=smem, size = 0x4, offset = 0x4, fixed_abs, tag = 'smem constant byte address 0x4 - core index']
  #allocation1 [shape = 'u32[144,128]{1,0:T(1,128)}', space=vmem, size = 0x12000, scoped, tag = 'internal scratch']
  %s0 = inlined_call_operand.vmem [shape: f32[9,1,256], index: 0, kind: input, shape index: {}]
  %s1 = inlined_call_operand.vmem [shape: f32[2,4,256], index: 1, kind: input, shape index: {}]
  %s2 = inlined_call_operand.vmem [shape: f32[8,4], index: 2, kind: input, shape index: {}]
  %s3 = inlined_call_operand.vmem [shape: f32[8,1], index: 3, kind: input, shape index: {}]
  %s4 = inlined_call_operand.vmem [shape: f32[8,72], index: 4, kind: input, shape index: {}]
  %s5 = inlined_call_operand.vmem [shape: f32[8,1], index: 5, kind: input, shape index: {}]
  %s6 = inlined_call_operand.vmem [shape: f32[8,72], index: 6, kind: input, shape index: {}]
  %s7 = inlined_call_operand.vmem [shape: f32[8,1], index: 7, kind: input, shape index: {}]
  %s8 = inlined_call_operand.hbm [shape: f32[2,8,256], index: 8, kind: output, shape index: {}]
  %s9 = sld [smem:[#allocation0]]
  $region65: #{tpu_custom_call.1} parent=0
    _
  %s11 = ssub.s32 1, %s9
  %s12 = scalar_select 0, %s11, %s9
  $region1: #{tpu_custom_call.1} parent=0
    #allocation2 [shape = 'u8[16384]{0}', space=vmem, size = 0x4000, scoped, tag = 'output window, operand 0']
    #allocation3 [shape = 's32[2]{0}', space=sflag, size = 0x8, scoped, tag = 'scoped memory for tpu_custom_call.1']
    %13 = vsyncpa [#allocation3], 0
    %s14 = scalar_lea.sflag [#allocation3], 1
    %15 = vsyncpa %s14, 0
    loop: start=0, step=1, limit=4
    $region2: #{tpu_custom_call.1} parent=1 // loop_pre_header
      _
    $region3: #{tpu_custom_call.1} parent=1 // loop_header
      %s17 = sphi 0, %s21
      %p18 = scmp.ge.s32.totalorder %s17, 4
      %s25 = sphi 0, %s25
      %s27 = sphi 0, %s25
      %s28 = sphi 0, %s27
      %s42 = sphi 0, %s28
      %s48 = sphi 0, %s50
      %s51 = sphi 0, %s48
      %s52 = sphi 0, %s51
      %s68 = sphi 0, %s52
      %s72 = sphi 0, %s72
      %s74 = sphi 0, %s72
      %s75 = sphi 0, %s74
      %s89 = sphi 0, %s75
      %s93 = sphi 0, %s93
      %s95 = sphi 0, %s93
      %s96 = sphi 0, %s95
      %s110 = sphi 0, %s96
      %s114 = sphi 0, %s114
      %s116 = sphi 0, %s114
      %s117 = sphi 0, %s116
      %s131 = sphi 0, %s117
      %s135 = sphi 0, %s135
      %s137 = sphi 0, %s135
      %s138 = sphi 0, %s137
      %s152 = sphi 0, %s138
      %s156 = sphi 0, %s156
      %s158 = sphi 0, %s156
      %s159 = sphi 0, %s158
      %s173 = sphi 0, %s159
      %s177 = sphi 0, %s177
      %s179 = sphi 0, %s177
      %s180 = sphi 0, %s179
      %s194 = sphi 0, %s180
      %s200 = sphi 0, %s202
      %s203 = sphi 0, %s200
      %s204 = sphi 0, %s203
      %s220 = sphi 0, %s204
    $region4: #{tpu_custom_call.1} parent=1 // loop_header_branch
      %20 = sbr.rel (%p18) target = $region8
    $region5: #{tpu_custom_call.1} parent=1 // loop_body
      %s22 = ssub.s32 %s17, 1
      %s23 = ssub.s32 %s17, 2
      %s24 = sadd.s32 %s17, 1
      %s26 = sadd.s32 %s25, 1
      %p29 = scmp.eq.s32.totalorder %s17, 1
      %p30 = scmp.ne.s32.totalorder %s25, %s27
      %p31 = scmp.eq.s32.totalorder %s17, 0
      %p32 = por %p30, %p31
      %p33 = scmp.ne.s32.totalorder %s25, %s27
      %p34 = scmp.eq.s32.totalorder %s22, 1
      %p35 = por %p33, %p34
      %p36 = scmp.ne.s32.totalorder %s27, %s28
      %p37 = scmp.eq.s32.totalorder %s22, 0
      %p38 = por %p36, %p37
      %p39 = scmp.ne.s32.totalorder %s27, %s28
      %p40 = scmp.eq.s32.totalorder %s23, 1
      %p41 = por %p39, %p40
      %p43 = scmp.ne.s32.totalorder %s28, %s42
      %p44 = scmp.eq.s32.totalorder %s23, 0
      %p45 = por %p43, %p44
      %s46 = ssub.s32 %s17, %s24
      %p47 = scmp.eq.s32.totalorder %s46, 0
      %s49 = sadd.s32 %s48, 1
      %s50 = scalar_select %p47, %s48, %s49
      %p53 = pneg %p47
      %p54 = scmp.eq.s32.totalorder %s17, 1
      %p55 = por %p53, %p54
      %p56 = scmp.ne.s32.totalorder %s48, %s51
      %p57 = scmp.eq.s32.totalorder %s17, 0
      %p58 = por %p56, %p57
      %p59 = scmp.ne.s32.totalorder %s48, %s51
      %p60 = scmp.eq.s32.totalorder %s22, 1
      %p61 = por %p59, %p60
      %p62 = scmp.ne.s32.totalorder %s51, %s52
      %p63 = scmp.eq.s32.totalorder %s22, 0
      %p64 = por %p62, %p63
      %p65 = scmp.ne.s32.totalorder %s51, %s52
      %p66 = scmp.eq.s32.totalorder %s23, 1
      %p67 = por %p65, %p66
      %p69 = scmp.ne.s32.totalorder %s52, %s68
      %p70 = scmp.eq.s32.totalorder %s23, 0
      %p71 = por %p69, %p70
      %s73 = sadd.s32 %s72, 1
      %p76 = scmp.eq.s32.totalorder %s17, 1
      %p77 = scmp.ne.s32.totalorder %s72, %s74
      %p78 = scmp.eq.s32.totalorder %s17, 0
      %p79 = por %p77, %p78
      %p80 = scmp.ne.s32.totalorder %s72, %s74
      %p81 = scmp.eq.s32.totalorder %s22, 1
      %p82 = por %p80, %p81
      %p83 = scmp.ne.s32.totalorder %s74, %s75
      %p84 = scmp.eq.s32.totalorder %s22, 0
      %p85 = por %p83, %p84
      %p86 = scmp.ne.s32.totalorder %s74, %s75
      %p87 = scmp.eq.s32.totalorder %s23, 1
      %p88 = por %p86, %p87
      %p90 = scmp.ne.s32.totalorder %s75, %s89
      %p91 = scmp.eq.s32.totalorder %s23, 0
      %p92 = por %p90, %p91
      %s94 = sadd.s32 %s93, 1
      %p97 = scmp.eq.s32.totalorder %s17, 1
      %p98 = scmp.ne.s32.totalorder %s93, %s95
      %p99 = scmp.eq.s32.totalorder %s17, 0
      %p100 = por %p98, %p99
      %p101 = scmp.ne.s32.totalorder %s93, %s95
      %p102 = scmp.eq.s32.totalorder %s22, 1
      %p103 = por %p101, %p102
      %p104 = scmp.ne.s32.totalorder %s95, %s96
      %p105 = scmp.eq.s32.totalorder %s22, 0
      %p106 = por %p104, %p105
      %p107 = scmp.ne.s32.totalorder %s95, %s96
      %p108 = scmp.eq.s32.totalorder %s23, 1
      %p109 = por %p107, %p108
      %p111 = scmp.ne.s32.totalorder %s96, %s110
      %p112 = scmp.eq.s32.totalorder %s23, 0
      %p113 = por %p111, %p112
      %s115 = sadd.s32 %s114, 1
      %p118 = scmp.eq.s32.totalorder %s17, 1
      %p119 = scmp.ne.s32.totalorder %s114, %s116
      %p120 = scmp.eq.s32.totalorder %s17, 0
      %p121 = por %p119, %p120
      %p122 = scmp.ne.s32.totalorder %s114, %s116
      %p123 = scmp.eq.s32.totalorder %s22, 1
      %p124 = por %p122, %p123
      %p125 = scmp.ne.s32.totalorder %s116, %s117
      %p126 = scmp.eq.s32.totalorder %s22, 0
      %p127 = por %p125, %p126
      %p128 = scmp.ne.s32.totalorder %s116, %s117
      %p129 = scmp.eq.s32.totalorder %s23, 1
      %p130 = por %p128, %p129
      %p132 = scmp.ne.s32.totalorder %s117, %s131
      %p133 = scmp.eq.s32.totalorder %s23, 0
      %p134 = por %p132, %p133
      %s136 = sadd.s32 %s135, 1
      %p139 = scmp.eq.s32.totalorder %s17, 1
      %p140 = scmp.ne.s32.totalorder %s135, %s137
      %p141 = scmp.eq.s32.totalorder %s17, 0
      %p142 = por %p140, %p141
      %p143 = scmp.ne.s32.totalorder %s135, %s137
      %p144 = scmp.eq.s32.totalorder %s22, 1
      %p145 = por %p143, %p144
      %p146 = scmp.ne.s32.totalorder %s137, %s138
      %p147 = scmp.eq.s32.totalorder %s22, 0
      %p148 = por %p146, %p147
      %p149 = scmp.ne.s32.totalorder %s137, %s138
      %p150 = scmp.eq.s32.totalorder %s23, 1
      %p151 = por %p149, %p150
      %p153 = scmp.ne.s32.totalorder %s138, %s152
      %p154 = scmp.eq.s32.totalorder %s23, 0
      %p155 = por %p153, %p154
      %s157 = sadd.s32 %s156, 1
      %p160 = scmp.eq.s32.totalorder %s17, 1
      %p161 = scmp.ne.s32.totalorder %s156, %s158
      %p162 = scmp.eq.s32.totalorder %s17, 0
      %p163 = por %p161, %p162
      %p164 = scmp.ne.s32.totalorder %s156, %s158
      %p165 = scmp.eq.s32.totalorder %s22, 1
      %p166 = por %p164, %p165
      %p167 = scmp.ne.s32.totalorder %s158, %s159
      %p168 = scmp.eq.s32.totalorder %s22, 0
      %p169 = por %p167, %p168
      %p170 = scmp.ne.s32.totalorder %s158, %s159
      %p171 = scmp.eq.s32.totalorder %s23, 1
      %p172 = por %p170, %p171
      %p174 = scmp.ne.s32.totalorder %s159, %s173
      %p175 = scmp.eq.s32.totalorder %s23, 0
      %p176 = por %p174, %p175
      %s178 = sadd.s32 %s177, 1
      %p181 = scmp.eq.s32.totalorder %s17, 1
      %p182 = scmp.ne.s32.totalorder %s177, %s179
      %p183 = scmp.eq.s32.totalorder %s17, 0
      %p184 = por %p182, %p183
      %p185 = scmp.ne.s32.totalorder %s177, %s179
      %p186 = scmp.eq.s32.totalorder %s22, 1
      %p187 = por %p185, %p186
      %p188 = scmp.ne.s32.totalorder %s179, %s180
      %p189 = scmp.eq.s32.totalorder %s22, 0
      %p190 = por %p188, %p189
      %p191 = scmp.ne.s32.totalorder %s179, %s180
      %p192 = scmp.eq.s32.totalorder %s23, 1
      %p193 = por %p191, %p192
      %p195 = scmp.ne.s32.totalorder %s180, %s194
      %p196 = scmp.eq.s32.totalorder %s23, 0
      %p197 = por %p195, %p196
      %s198 = ssub.s32 %s17, %s24
      %p199 = scmp.eq.s32.totalorder %s198, 0
      %s201 = sadd.s32 %s200, 1
      %s202 = scalar_select %p199, %s200, %s201
      %p205 = pneg %p199
      %p206 = scmp.eq.s32.totalorder %s17, 1
      %p207 = por %p205, %p206
      %p208 = scmp.ne.s32.totalorder %s200, %s203
      %p209 = scmp.eq.s32.totalorder %s17, 0
      %p210 = por %p208, %p209
      %p211 = scmp.ne.s32.totalorder %s200, %s203
      %p212 = scmp.eq.s32.totalorder %s22, 1
      %p213 = por %p211, %p212
      %p214 = scmp.ne.s32.totalorder %s203, %s204
      %p215 = scmp.eq.s32.totalorder %s22, 0
      %p216 = por %p214, %p215
      %p217 = scmp.ne.s32.totalorder %s203, %s204
      %p218 = scmp.eq.s32.totalorder %s23, 1
      %p219 = por %p217, %p218
      %p221 = scmp.ne.s32.totalorder %s204, %s220
      %p222 = scmp.eq.s32.totalorder %s23, 0
      %p223 = por %p221, %p222
      %p224 = scmp.le.s32.totalorder 1, %s17
      %p225 = scmp.lt.s32.totalorder %s17, 3
      %p226 = pnand %p224, %p225
      %p227 = pneg %p226
      // Predicated region
      $region9: #{tpu_custom_call.1} parent=5 // pred_check
        _
      $region10: #{tpu_custom_call.1} parent=5 // pred_check_branch
        %229 = sbr.rel (%p226) target = $region12
      $region11: #{tpu_custom_call.1} parent=5 // pred_region
        %s230 = ssub.s32 %s17, 1
        // Predicated region
        $region13: #{tpu_custom_call.1} parent=11 // pred_check
          %p231 = pneg %p38
        $region14: #{tpu_custom_call.1} parent=11 // pred_check_branch
          %233 = sbr.rel (%p231) target = $region16
        $region15: #{tpu_custom_call.1} parent=11 // pred_region
          _
        $region16: #{tpu_custom_call.1} parent=11 // pred_fallthru
          _
        // Predicated region
        $region17: #{tpu_custom_call.1} parent=11 // pred_check
          %p234 = pneg %p85
        $region18: #{tpu_custom_call.1} parent=11 // pred_check_branch
          %236 = sbr.rel (%p234) target = $region20
        $region19: #{tpu_custom_call.1} parent=11 // pred_region
          _
        $region20: #{tpu_custom_call.1} parent=11 // pred_fallthru
          _
        // Predicated region
        $region21: #{tpu_custom_call.1} parent=11 // pred_check
          %p237 = pneg %p106
        $region22: #{tpu_custom_call.1} parent=11 // pred_check_branch
          %239 = sbr.rel (%p237) target = $region24
        $region23: #{tpu_custom_call.1} parent=11 // pred_region
          _
        $region24: #{tpu_custom_call.1} parent=11 // pred_fallthru
          _
        // Predicated region
        $region25: #{tpu_custom_call.1} parent=11 // pred_check
          %p240 = pneg %p127
        $region26: #{tpu_custom_call.1} parent=11 // pred_check_branch
          %242 = sbr.rel (%p240) target = $region28
        $region27: #{tpu_custom_call.1} parent=11 // pred_region
          _
        $region28: #{tpu_custom_call.1} parent=11 // pred_fallthru
          _
        // Predicated region
        $region29: #{tpu_custom_call.1} parent=11 // pred_check
          %p243 = pneg %p148
        $region30: #{tpu_custom_call.1} parent=11 // pred_check_branch
          %245 = sbr.rel (%p243) target = $region32
        $region31: #{tpu_custom_call.1} parent=11 // pred_region
          _
        $region32: #{tpu_custom_call.1} parent=11 // pred_fallthru
          _
        // Predicated region
        $region33: #{tpu_custom_call.1} parent=11 // pred_check
          %p246 = pneg %p169
        $region34: #{tpu_custom_call.1} parent=11 // pred_check_branch
          %248 = sbr.rel (%p246) target = $region36
        $region35: #{tpu_custom_call.1} parent=11 // pred_region
          _
        $region36: #{tpu_custom_call.1} parent=11 // pred_fallthru
          _
        // Predicated region
        $region37: #{tpu_custom_call.1} parent=11 // pred_check
          %p249 = pneg %p190
        $region38: #{tpu_custom_call.1} parent=11 // pred_check_branch
          %251 = sbr.rel (%p249) target = $region40
        $region39: #{tpu_custom_call.1} parent=11 // pred_region
          _
        $region40: #{tpu_custom_call.1} parent=11 // pred_fallthru
          _
      $region12: #{tpu_custom_call.1} parent=5 // pred_fallthru
        _
      %p252 = scmp.lt.s32.totalorder %s17, 2
      // Predicated region
      $region41: #{tpu_custom_call.1} parent=5 // pred_check
        %p253 = pneg %p252
      $region42: #{tpu_custom_call.1} parent=5 // pred_check_branch
        %255 = sbr.rel (%p253) target = $region44
      $region43: #{tpu_custom_call.1} parent=5 // pred_region
        // Predicated region
        $region45: #{tpu_custom_call.1} parent=43 // pred_check
          %p256 = pneg %p58
        $region46: #{tpu_custom_call.1} parent=43 // pred_check_branch
          %258 = sbr.rel (%p256) target = $region48
        $region47: #{tpu_custom_call.1} parent=43 // pred_region
          %p259 = scmp.lt.s32.totalorder %s17, 1
          %s260 = scalar_select %p259, %s17, 1
          %s261 = smul.addr %s260, 2
          %s262 = smul.addr %s261, 4
          %s263 = scalar_lea.vmem %s1, %s262
        $region48: #{tpu_custom_call.1} parent=43 // pred_fallthru
          _
      $region44: #{tpu_custom_call.1} parent=5 // pred_fallthru
        _
      %p264 = scmp.le.s32.totalorder 1, %s17
      %p265 = scmp.lt.s32.totalorder %s17, 3
      %p266 = pnand %p264, %p265
      %p267 = pneg %p266
      // Predicated region
      $region49: #{tpu_custom_call.1} parent=5 // pred_check
        _
      $region50: #{tpu_custom_call.1} parent=5 // pred_check_branch
        %269 = sbr.rel (%p266) target = $region52
      $region51: #{tpu_custom_call.1} parent=5 // pred_region
        %s270 = ssub.s32 %s17, 1
        %p271 = pneg %p38
        %p272 = pneg %p35
        %p273 = scmp.lt.s32.totalorder %s22, 1
        %s274 = scalar_select %p273, %s22, 1
        %s275 = smul.addr %s274, 2
        %s276 = smul.addr %s275, 4
        %s277 = scalar_lea.vmem %s1, %s276
        %p278 = pneg %p64
        %p279 = pneg %p61
        %p280 = pneg %p85
        %p281 = pneg %p82
        %p282 = pneg %p106
        %p283 = pneg %p103
        %p284 = pneg %p127
        %p285 = pneg %p124
        %p286 = pneg %p148
        %p287 = pneg %p145
        %p288 = pneg %p169
        %p289 = pneg %p166
        %p290 = pneg %p190
        %p291 = pneg %p187
        %p292 = pneg %p216
        %p293 = pneg %p213
        %s294 = sand.u32 %s203, 1
        %s295 = scalar_lea.sflag [#allocation3], %s294
        %s296 = sand.u32 %s203, 1
        %s297 = smul.addr %s296, 16
        %s298 = scalar_lea.vmem [#allocation2], %s297
        %p299 = scmp.lt.s32.totalorder %s22, 1
        %s300 = scalar_select %p299, %s22, 1
        %s301 = smul.addr %s300, 2
        %s302 = smul.addr %s301, 4
        %s303 = scalar_lea.vmem %s1, %s302
        %v304 = vld [vmem:[%s303] sm:$0xff]
        %v305 = vld [vmem:[%s2] sm:$0xff]
        %v306 = vld [vmem:[%s3] sm:$0xff]
        %308 = vset.pattern.permute.xlu0 0
        %309 = vperm.xlu0 %308, %v306
        %v310 = vpop.permute.xlu0 %309
        %v313 = vcombine.high %v304, %v304
        %vm314 = vcmask 31744
        %v316 = vsel %vm314, %v305, 0
        %vm318 = vcmask 1043456
        %v319 = vsel %vm318, %v304, 0
        %v321 = vsel %vm318, %v313, 0
        %323 = vmatprep.subr.mxu0 %v321
        %324 = vmatpush1.msra.mxu0 %v319
        %325 = vmatprep.subr.mxu0 0.0
        %326 = vmatpush1.msra.mxu0 0.0
        %327 = vmatprep.subr.mxu0 0.0
        %328 = vmatpush1.msra.mxu0 0.0
        %329 = vmatprep.subr.mxu0 0.0
        %330 = vmatpush1.msra.mxu0 0.0
        %331 = vmatprep.subr.mxu0 0.0
        %332 = vmatpush1.msra.mxu0 0.0
        %333 = vmatprep.subr.mxu0 0.0
        %334 = vmatpush1.msra.mxu0 0.0
        %335 = vmatprep.subr.mxu0 0.0
        %336 = vmatpush1.msra.mxu0 0.0
        %337 = vmatprep.subr.mxu0 0.0
        %338 = vmatpush1.msra.mxu0 0.0
        %339 = vmatprep.subr.mxu0 0.0
        %340 = vmatpush1.msra.mxu0 0.0
        %341 = vmatprep.subr.mxu0 0.0
        %342 = vmatpush1.msra.mxu0 0.0
        %343 = vmatprep.subr.mxu0 0.0
        %344 = vmatpush1.msra.mxu0 0.0
        %345 = vmatprep.subr.mxu0 0.0
        %346 = vmatpush1.msra.mxu0 0.0
        %347 = vmatprep.subr.mxu0 0.0
        %348 = vmatpush1.msra.mxu0 0.0
        %349 = vmatprep.subr.mxu0 0.0
        %350 = vmatpush1.msra.mxu0 0.0
        %351 = vmatprep.subr.mxu0 0.0
        %352 = vmatpush1.msra.mxu0 0.0
        %353 = vmatprep.subr.mxu0 0.0
        %354 = vmatpush1.msra.mxu0 0.0
        %355 = vmatprep.subr.mxu0 0.0
        %356 = vmatpush1.msra.mxu0 0.0
        %357 = vmatprep.subr.mxu0 0.0
        %358 = vmatpush1.msra.mxu0 0.0
        %359 = vmatprep.subr.mxu0 0.0
        %360 = vmatpush1.msra.mxu0 0.0
        %361 = vmatprep.subr.mxu0 0.0
        %362 = vmatpush1.msra.mxu0 0.0
        %363 = vmatprep.subr.mxu0 0.0
        %364 = vmatpush1.msra.mxu0 0.0
        %365 = vmatprep.subr.mxu0 0.0
        %366 = vmatpush1.msra.mxu0 0.0
        %367 = vmatprep.subr.mxu0 0.0
        %368 = vmatpush1.msra.mxu0 0.0
        %369 = vmatprep.subr.mxu0 0.0
        %370 = vmatpush1.msra.mxu0 0.0
        %371 = vmatprep.subr.mxu0 0.0
        %372 = vmatpush1.msra.mxu0 0.0
        %373 = vmatprep.subr.mxu0 0.0
        %374 = vmatpush1.msra.mxu0 0.0
        %375 = vmatprep.subr.mxu0 0.0
        %376 = vmatpush1.msra.mxu0 0.0
        %377 = vmatprep.subr.mxu0 0.0
        %378 = vmatpush1.msra.mxu0 0.0
        %379 = vmatprep.subr.mxu0 0.0
        %380 = vmatpush1.msra.mxu0 0.0
        %381 = vmatprep.subr.mxu0 0.0
        %382 = vmatpush1.msra.mxu0 0.0
        %383 = vmatprep.subr.mxu0 0.0
        %384 = vmatpush1.msra.mxu0 0.0
        %385 = vmatprep.subr.mxu0 0.0
        %386 = vmatpush1.msra.mxu0 0.0
        %387 = vmatprep.mubr.f32.mxu0 0.0
        %388 = vmatmul.mubr.f32.gmra.mrb[0].mxu0 %v316
        %v389 = vpop.f32.mrb[0].mxu0
        %v390 = vadd.f32 %v310, %v389
        %v391 = vpop.f32.mrb[0].mxu0
        %v392 = vadd.f32 %v310, %v391
        %393 = vdwg.mxu0
        %v394 = vmax.f32 %v390, 0.0
        %v395 = vmax.f32 %v392, 0.0
        %396 = vrot.lane.b32.xlu0 %v394, 17
        %v397 = vpop.permute.xlu0 %396
        %398 = vrot.lane.b32.xlu0 %v395, 17
        %v399 = vpop.permute.xlu0 %398
        %v400 = vlaneseq
        %v401 = vand.u32 %v400, 127
        %vm402 = vcmp.lt.s32.totalorder %v401, 17
        %v403 = vsel %vm402, %v397, %v399
        %v404 = vsel %vm402, %v399, %v397
        %v405 = vld [vmem:[%s0] sm:$0x3]
        %v407 = vlaneseq
        %v408 = vshrl.u32 %v407, 7
        %v409 = vsub.s32 0, %v408
        %v410 = vrot.slane %v405, %v409
        %v411 = vlaneseq
        %v412 = vshrl.u32 %v411, 7
        %v413 = vsub.s32 1, %v412
        %v414 = vrot.slane %v405, %v413
        %v417 = vmul.f32 %v404, %v410
        %v418 = vmul.f32 %v403, %v414
        %419 = vrot.lane.b32.xlu0 %v394, 16
        %v420 = vpop.permute.xlu0 %419
        %421 = vrot.lane.b32.xlu0 %v395, 16
        %v422 = vpop.permute.xlu0 %421
        %vm423 = vcmp.lt.s32.totalorder %v401, 16
        %v424 = vsel %vm423, %v420, %v422
        %v425 = vsel %vm423, %v422, %v420
        %s426 = scalar_lea.vmem %s0, 2
        %v427 = vld [vmem:[%s426] sm:$0x3]
        %v429 = vlaneseq
        %v430 = vshrl.u32 %v429, 7
        %v431 = vsub.s32 0, %v430
        %v432 = vrot.slane %v427, %v431
        %v433 = vlaneseq
        %v434 = vshrl.u32 %v433, 7
        %v435 = vsub.s32 1, %v434
        %v436 = vrot.slane %v427, %v435
        %v439 = vmul.f32 %v425, %v432
        %v440 = vmul.f32 %v424, %v436
        %441 = vrot.lane.b32.xlu0 %v394, 15
        %v442 = vpop.permute.xlu0 %441
        %443 = vrot.lane.b32.xlu0 %v395, 15
        %v444 = vpop.permute.xlu0 %443
        %vm445 = vcmp.lt.s32.totalorder %v401, 15
        %v446 = vsel %vm445, %v442, %v444
        %v447 = vsel %vm445, %v444, %v442
        %s448 = scalar_lea.vmem %s0, 4
        %v449 = vld [vmem:[%s448] sm:$0x3]
        %v451 = vlaneseq
        %v452 = vshrl.u32 %v451, 7
        %v453 = vsub.s32 0, %v452
        %v454 = vrot.slane %v449, %v453
        %v455 = vlaneseq
        %v456 = vshrl.u32 %v455, 7
        %v457 = vsub.s32 1, %v456
        %v458 = vrot.slane %v449, %v457
        %v461 = vmul.f32 %v447, %v454
        %v462 = vmul.f32 %v446, %v458
        %463 = vrot.lane.b32.xlu0 %v394, 1
        %v464 = vpop.permute.xlu0 %463
        %465 = vrot.lane.b32.xlu0 %v395, 1
        %v466 = vpop.permute.xlu0 %465
        %vm467 = vcmp.lt.s32.totalorder %v401, 1
        %v468 = vsel %vm467, %v464, %v466
        %v469 = vsel %vm467, %v466, %v464
        %s470 = scalar_lea.vmem %s0, 6
        %v471 = vld [vmem:[%s470] sm:$0x3]
        %v473 = vlaneseq
        %v474 = vshrl.u32 %v473, 7
        %v475 = vsub.s32 0, %v474
        %v476 = vrot.slane %v471, %v475
        %v477 = vlaneseq
        %v478 = vshrl.u32 %v477, 7
        %v479 = vsub.s32 1, %v478
        %v480 = vrot.slane %v471, %v479
        %v483 = vmul.f32 %v469, %v476
        %v484 = vmul.f32 %v468, %v480
        %s485 = scalar_lea.vmem %s0, 8
        %v486 = vld [vmem:[%s485] sm:$0x3]
        %v488 = vlaneseq
        %v489 = vshrl.u32 %v488, 7
        %v490 = vsub.s32 0, %v489
        %v491 = vrot.slane %v486, %v490
        %v492 = vlaneseq
        %v493 = vshrl.u32 %v492, 7
        %v494 = vsub.s32 1, %v493
        %v495 = vrot.slane %v486, %v494
        %v498 = vmul.f32 %v394, %v491
        %v499 = vmul.f32 %v395, %v495
        %500 = vrot.lane.b32.xlu0 %v394, 127
        %v501 = vpop.permute.xlu0 %500
        %502 = vrot.lane.b32.xlu0 %v395, 127
        %v503 = vpop.permute.xlu0 %502
        %vm504 = vcmp.lt.s32.totalorder %v401, 127
        %v505 = vsel %vm504, %v501, %v503
        %v506 = vsel %vm504, %v503, %v501
        %s507 = scalar_lea.vmem %s0, 10
        %v508 = vld [vmem:[%s507] sm:$0x3]
        %v510 = vlaneseq
        %v511 = vshrl.u32 %v510, 7
        %v512 = vsub.s32 0, %v511
        %v513 = vrot.slane %v508, %v512
        %v514 = vlaneseq
        %v515 = vshrl.u32 %v514, 7
        %v516 = vsub.s32 1, %v515
        %v517 = vrot.slane %v508, %v516
        %v520 = vmul.f32 %v505, %v513
        %v521 = vmul.f32 %v506, %v517
        %522 = vrot.lane.b32.xlu0 %v394, 113
        %v523 = vpop.permute.xlu0 %522
        %524 = vrot.lane.b32.xlu0 %v395, 113
        %v525 = vpop.permute.xlu0 %524
        %vm526 = vcmp.lt.s32.totalorder %v401, 113
        %v527 = vsel %vm526, %v523, %v525
        %v528 = vsel %vm526, %v525, %v523
        %s529 = scalar_lea.vmem %s0, 12
        %v530 = vld [vmem:[%s529] sm:$0x3]
        %v532 = vlaneseq
        %v533 = vshrl.u32 %v532, 7
        %v534 = vsub.s32 0, %v533
        %v535 = vrot.slane %v530, %v534
        %v536 = vlaneseq
        %v537 = vshrl.u32 %v536, 7
        %v538 = vsub.s32 1, %v537
        %v539 = vrot.slane %v530, %v538
        %v542 = vmul.f32 %v527, %v535
        %v543 = vmul.f32 %v528, %v539
        %544 = vrot.lane.b32.xlu0 %v394, 112
        %v545 = vpop.permute.xlu0 %544
        %546 = vrot.lane.b32.xlu0 %v395, 112
        %v547 = vpop.permute.xlu0 %546
        %vm548 = vcmp.lt.s32.totalorder %v401, 112
        %v549 = vsel %vm548, %v545, %v547
        %v550 = vsel %vm548, %v547, %v545
        %s551 = scalar_lea.vmem %s0, 14
        %v552 = vld [vmem:[%s551] sm:$0x3]
        %v554 = vlaneseq
        %v555 = vshrl.u32 %v554, 7
        %v556 = vsub.s32 0, %v555
        %v557 = vrot.slane %v552, %v556
        %v558 = vlaneseq
        %v559 = vshrl.u32 %v558, 7
        %v560 = vsub.s32 1, %v559
        %v561 = vrot.slane %v552, %v560
        %v564 = vmul.f32 %v549, %v557
        %v565 = vmul.f32 %v550, %v561
        %566 = vrot.lane.b32.xlu0 %v394, 111
        %v567 = vpop.permute.xlu0 %566
        %568 = vrot.lane.b32.xlu0 %v395, 111
        %v569 = vpop.permute.xlu0 %568
        %vm570 = vcmp.lt.s32.totalorder %v401, 111
        %v571 = vsel %vm570, %v567, %v569
        %v572 = vsel %vm570, %v569, %v567
        %s573 = scalar_lea.vmem %s0, 16
        %v574 = vld [vmem:[%s573] sm:$0x3]
        %v576 = vlaneseq
        %v577 = vshrl.u32 %v576, 7
        %v578 = vsub.s32 0, %v577
        %v579 = vrot.slane %v574, %v578
        %v580 = vlaneseq
        %v581 = vshrl.u32 %v580, 7
        %v582 = vsub.s32 1, %v581
        %v583 = vrot.slane %v574, %v582
        %v586 = vmul.f32 %v571, %v579
        %v587 = vmul.f32 %v572, %v583
        %v588 = vld [vmem:[%s4] sm:$0xff]
        %v589 = vld [vmem:[%s5] sm:$0xff]
        %591 = vset.pattern.permute.xlu0 0
        %592 = vperm.xlu0 %591, %v589
        %v593 = vpop.permute.xlu0 %592
        %vm595 = vcmask 588800
        %v597 = vsel %vm595, %v588, 0
        %599 = vmatprep.subr.mxu0 %v418
        %600 = vmatpush1.msra.mxu0 %v417
        %601 = vmatprep.subr.mxu0 %v440
        %602 = vmatpush1.msra.mxu0 %v439
        %603 = vmatprep.subr.mxu0 %v462
        %604 = vmatpush1.msra.mxu0 %v461
        %605 = vmatprep.subr.mxu0 %v484
        %606 = vmatpush1.msra.mxu0 %v483
        %607 = vmatprep.subr.mxu0 %v499
        %608 = vmatpush1.msra.mxu0 %v498
        %609 = vmatprep.subr.mxu0 %v521
        %610 = vmatpush1.msra.mxu0 %v520
        %611 = vmatprep.subr.mxu0 %v543
        %612 = vmatpush1.msra.mxu0 %v542
        %613 = vmatprep.subr.mxu0 %v565
        %614 = vmatpush1.msra.mxu0 %v564
        %615 = vmatprep.subr.mxu0 %v587
        %616 = vmatpush1.msra.mxu0 %v586
        %617 = vmatprep.subr.mxu0 0.0
        %618 = vmatpush1.msra.mxu0 0.0
        %619 = vmatprep.subr.mxu0 0.0
        %620 = vmatpush1.msra.mxu0 0.0
        %621 = vmatprep.subr.mxu0 0.0
        %622 = vmatpush1.msra.mxu0 0.0
        %623 = vmatprep.subr.mxu0 0.0
        %624 = vmatpush1.msra.mxu0 0.0
        %625 = vmatprep.subr.mxu0 0.0
        %626 = vmatpush1.msra.mxu0 0.0
        %627 = vmatprep.subr.mxu0 0.0
        %628 = vmatpush1.msra.mxu0 0.0
        %629 = vmatprep.subr.mxu0 0.0
        %630 = vmatpush1.msra.mxu0 0.0
        %631 = vmatprep.subr.mxu0 0.0
        %632 = vmatpush1.msra.mxu0 0.0
        %633 = vmatprep.subr.mxu0 0.0
        %634 = vmatpush1.msra.mxu0 0.0
        %635 = vmatprep.subr.mxu0 0.0
        %636 = vmatpush1.msra.mxu0 0.0
        %637 = vmatprep.subr.mxu0 0.0
        %638 = vmatpush1.msra.mxu0 0.0
        %639 = vmatprep.subr.mxu0 0.0
        %640 = vmatpush1.msra.mxu0 0.0
        %641 = vmatprep.subr.mxu0 0.0
        %642 = vmatpush1.msra.mxu0 0.0
        %643 = vmatprep.subr.mxu0 0.0
        %644 = vmatpush1.msra.mxu0 0.0
        %645 = vmatprep.subr.mxu0 0.0
        %646 = vmatpush1.msra.mxu0 0.0
        %647 = vmatprep.subr.mxu0 0.0
        %648 = vmatpush1.msra.mxu0 0.0
        %649 = vmatprep.subr.mxu0 0.0
        %650 = vmatpush1.msra.mxu0 0.0
        %651 = vmatprep.subr.mxu0 0.0
        %652 = vmatpush1.msra.mxu0 0.0
        %653 = vmatprep.subr.mxu0 0.0
        %654 = vmatpush1.msra.mxu0 0.0
        %655 = vmatprep.subr.mxu0 0.0
        %656 = vmatpush1.msra.mxu0 0.0
        %657 = vmatprep.subr.mxu0 0.0
        %658 = vmatpush1.msra.mxu0 0.0
        %659 = vmatprep.subr.mxu0 0.0
        %660 = vmatpush1.msra.mxu0 0.0
        %661 = vmatprep.subr.mxu0 0.0
        %662 = vmatpush1.msra.mxu0 0.0
        %663 = vmatprep.mubr.f32.mxu0 0.0
        %664 = vmatmul.mubr.f32.gmra.mrb[0].mxu0 %v597
        %v665 = vpop.f32.mrb[0].mxu0
        %v666 = vadd.f32 %v593, %v665
        %v667 = vpop.f32.mrb[0].mxu0
        %v668 = vadd.f32 %v593, %v667
        %669 = vdwg.mxu0
        %v670 = vmax.f32 %v666, 0.0
        %v671 = vmax.f32 %v668, 0.0
        %v672 = vadd.f32 %v394, %v670
        %v673 = vadd.f32 %v395, %v671
        %674 = vrot.lane.b32.xlu0 %v672, 17
        %v675 = vpop.permute.xlu0 %674
        %676 = vrot.lane.b32.xlu0 %v673, 17
        %v677 = vpop.permute.xlu0 %676
        %v678 = vsel %vm402, %v675, %v677
        %v679 = vsel %vm402, %v677, %v675
        %v680 = vmul.f32 %v679, %v410
        %v681 = vmul.f32 %v678, %v414
        %682 = vrot.lane.b32.xlu0 %v672, 16
        %v683 = vpop.permute.xlu0 %682
        %684 = vrot.lane.b32.xlu0 %v673, 16
        %v685 = vpop.permute.xlu0 %684
        %v686 = vsel %vm423, %v683, %v685
        %v687 = vsel %vm423, %v685, %v683
        %v688 = vmul.f32 %v687, %v432
        %v689 = vmul.f32 %v686, %v436
        %690 = vrot.lane.b32.xlu0 %v672, 15
        %v691 = vpop.permute.xlu0 %690
        %692 = vrot.lane.b32.xlu0 %v673, 15
        %v693 = vpop.permute.xlu0 %692
        %v694 = vsel %vm445, %v691, %v693
        %v695 = vsel %vm445, %v693, %v691
        %v696 = vmul.f32 %v695, %v454
        %v697 = vmul.f32 %v694, %v458
        %698 = vrot.lane.b32.xlu0 %v672, 1
        %v699 = vpop.permute.xlu0 %698
        %700 = vrot.lane.b32.xlu0 %v673, 1
        %v701 = vpop.permute.xlu0 %700
        %v702 = vsel %vm467, %v699, %v701
        %v703 = vsel %vm467, %v701, %v699
        %v704 = vmul.f32 %v703, %v476
        %v705 = vmul.f32 %v702, %v480
        %v706 = vmul.f32 %v672, %v491
        %v707 = vmul.f32 %v673, %v495
        %708 = vrot.lane.b32.xlu0 %v672, 127
        %v709 = vpop.permute.xlu0 %708
        %710 = vrot.lane.b32.xlu0 %v673, 127
        %v711 = vpop.permute.xlu0 %710
        %v712 = vsel %vm504, %v709, %v711
        %v713 = vsel %vm504, %v711, %v709
        %v714 = vmul.f32 %v712, %v513
        %v715 = vmul.f32 %v713, %v517
        %716 = vrot.lane.b32.xlu0 %v672, 113
        %v717 = vpop.permute.xlu0 %716
        %718 = vrot.lane.b32.xlu0 %v673, 113
        %v719 = vpop.permute.xlu0 %718
        %v720 = vsel %vm526, %v717, %v719
        %v721 = vsel %vm526, %v719, %v717
        %v722 = vmul.f32 %v720, %v535
        %v723 = vmul.f32 %v721, %v539
        %724 = vrot.lane.b32.xlu0 %v672, 112
        %v725 = vpop.permute.xlu0 %724
        %726 = vrot.lane.b32.xlu0 %v673, 112
        %v727 = vpop.permute.xlu0 %726
        %v728 = vsel %vm548, %v725, %v727
        %v729 = vsel %vm548, %v727, %v725
        %v730 = vmul.f32 %v728, %v557
        %v731 = vmul.f32 %v729, %v561
        %732 = vrot.lane.b32.xlu0 %v672, 111
        %v733 = vpop.permute.xlu0 %732
        %734 = vrot.lane.b32.xlu0 %v673, 111
        %v735 = vpop.permute.xlu0 %734
        %v736 = vsel %vm570, %v733, %v735
        %v737 = vsel %vm570, %v735, %v733
        %v738 = vmul.f32 %v736, %v579
        %v739 = vmul.f32 %v737, %v583
        %v740 = vld [vmem:[%s6] sm:$0xff]
        %v741 = vld [vmem:[%s7] sm:$0xff]
        %743 = vset.pattern.permute.xlu0 0
        %744 = vperm.xlu0 %743, %v741
        %v745 = vpop.permute.xlu0 %744
        %v748 = vsel %vm595, %v740, 0
        %750 = vmatprep.subr.mxu0 %v681
        %751 = vmatpush1.msra.mxu0 %v680
        %752 = vmatprep.subr.mxu0 %v689
        %753 = vmatpush1.msra.mxu0 %v688
        %754 = vmatprep.subr.mxu0 %v697
        %755 = vmatpush1.msra.mxu0 %v696
        %756 = vmatprep.subr.mxu0 %v705
        %757 = vmatpush1.msra.mxu0 %v704
        %758 = vmatprep.subr.mxu0 %v707
        %759 = vmatpush1.msra.mxu0 %v706
        %760 = vmatprep.subr.mxu0 %v715
        %761 = vmatpush1.msra.mxu0 %v714
        %762 = vmatprep.subr.mxu0 %v723
        %763 = vmatpush1.msra.mxu0 %v722
        %764 = vmatprep.subr.mxu0 %v731
        %765 = vmatpush1.msra.mxu0 %v730
        %766 = vmatprep.subr.mxu0 %v739
        %767 = vmatpush1.msra.mxu0 %v738
        %768 = vmatprep.subr.mxu0 0.0
        %769 = vmatpush1.msra.mxu0 0.0
        %770 = vmatprep.subr.mxu0 0.0
        %771 = vmatpush1.msra.mxu0 0.0
        %772 = vmatprep.subr.mxu0 0.0
        %773 = vmatpush1.msra.mxu0 0.0
        %774 = vmatprep.subr.mxu0 0.0
        %775 = vmatpush1.msra.mxu0 0.0
        %776 = vmatprep.subr.mxu0 0.0
        %777 = vmatpush1.msra.mxu0 0.0
        %778 = vmatprep.subr.mxu0 0.0
        %779 = vmatpush1.msra.mxu0 0.0
        %780 = vmatprep.subr.mxu0 0.0
        %781 = vmatpush1.msra.mxu0 0.0
        %782 = vmatprep.subr.mxu0 0.0
        %783 = vmatpush1.msra.mxu0 0.0
        %784 = vmatprep.subr.mxu0 0.0
        %785 = vmatpush1.msra.mxu0 0.0
        %786 = vmatprep.subr.mxu0 0.0
        %787 = vmatpush1.msra.mxu0 0.0
        %788 = vmatprep.subr.mxu0 0.0
        %789 = vmatpush1.msra.mxu0 0.0
        %790 = vmatprep.subr.mxu0 0.0
        %791 = vmatpush1.msra.mxu0 0.0
        %792 = vmatprep.subr.mxu0 0.0
        %793 = vmatpush1.msra.mxu0 0.0
        %794 = vmatprep.subr.mxu0 0.0
        %795 = vmatpush1.msra.mxu0 0.0
        %796 = vmatprep.subr.mxu0 0.0
        %797 = vmatpush1.msra.mxu0 0.0
        %798 = vmatprep.subr.mxu0 0.0
        %799 = vmatpush1.msra.mxu0 0.0
        %800 = vmatprep.subr.mxu0 0.0
        %801 = vmatpush1.msra.mxu0 0.0
        %802 = vmatprep.subr.mxu0 0.0
        %803 = vmatpush1.msra.mxu0 0.0
        %804 = vmatprep.subr.mxu0 0.0
        %805 = vmatpush1.msra.mxu0 0.0
        %806 = vmatprep.subr.mxu0 0.0
        %807 = vmatpush1.msra.mxu0 0.0
        %808 = vmatprep.subr.mxu0 0.0
        %809 = vmatpush1.msra.mxu0 0.0
        %810 = vmatprep.subr.mxu0 0.0
        %811 = vmatpush1.msra.mxu0 0.0
        %812 = vmatprep.subr.mxu0 0.0
        %813 = vmatpush1.msra.mxu0 0.0
        %814 = vmatprep.mubr.f32.mxu0 0.0
        %815 = vmatmul.mubr.f32.gmra.mrb[0].mxu0 %v748
        %v816 = vpop.f32.mrb[0].mxu0
        %v817 = vadd.f32 %v745, %v816
        %v818 = vpop.f32.mrb[0].mxu0
        %v819 = vadd.f32 %v745, %v818
        %820 = vdwg.mxu0
        %v821 = vmax.f32 %v817, 0.0
        %v822 = vmax.f32 %v819, 0.0
        %v823 = vadd.f32 %v672, %v821
        %v824 = vadd.f32 %v673, %v822
        %825 = vst [vmem:[%s298] sm:$0xff] %v823
        %826 = vst [vmem:[%s298 + $0x8] sm:$0xff] %v824
        %s827 = sand.u32 %s203, 1
        %s828 = scalar_lea.sflag [#allocation3], %s827
        %s829 = sand.u32 %s203, 1
        %s830 = smul.addr %s829, 16
        %s831 = scalar_lea.vmem [#allocation2], %s830
        // Predicated region
        $region53: #{tpu_custom_call.1} parent=51 // pred_check
          %p832 = pneg %p213
        $region54: #{tpu_custom_call.1} parent=51 // pred_check_branch
          %834 = sbr.rel (%p832) target = $region56
        $region55: #{tpu_custom_call.1} parent=51 // pred_region
          %s836 = ssub.s32 256, 256
          %837 = vsyncadd %s828, %s836
          %s838 = smul.addr %s22, 2
          %s839 = smul.addr %s838, 128
          %s840 = scalar_lea.hbm %s8, %s839
          %s842 = sshll.u32 %s831, 4
          %s843 = int_to_ptr.vmem [resolvable:$true] %s842
          %845 = dma.vmem_to_hbm [thread:$0]  %s843, 256, %s840, %s828
        $region56: #{tpu_custom_call.1} parent=51 // pred_fallthru
          _
      $region52: #{tpu_custom_call.1} parent=5 // pred_fallthru
        _
      %p846 = scmp.le.s32.totalorder 2, %s17
      // Predicated region
      $region57: #{tpu_custom_call.1} parent=5 // pred_check
        %p847 = pneg %p846
      $region58: #{tpu_custom_call.1} parent=5 // pred_check_branch
        %849 = sbr.rel (%p847) target = $region60
      $region59: #{tpu_custom_call.1} parent=5 // pred_region
        %s850 = ssub.s32 %s17, 2
        // Predicated region
        $region61: #{tpu_custom_call.1} parent=59 // pred_check
          %p851 = pneg %p219
        $region62: #{tpu_custom_call.1} parent=59 // pred_check_branch
          %853 = sbr.rel (%p851) target = $region64
        $region63: #{tpu_custom_call.1} parent=59 // pred_region
          %s854 = sand.u32 %s204, 1
          %s855 = scalar_lea.sflag [#allocation3], %s854
          %s856 = sand.u32 %s204, 1
          %s857 = smul.addr %s856, 16
          %s858 = scalar_lea.vmem [#allocation2], %s857
          %859 = dma.done %s855, 256
        $region64: #{tpu_custom_call.1} parent=59 // pred_fallthru
          _
      $region60: #{tpu_custom_call.1} parent=5 // pred_fallthru
        _
    $region6: #{tpu_custom_call.1} parent=1 // loop_footer
      %s21 = sadd.s32 1, %s17
    $region7: #{tpu_custom_call.1} parent=1 // loop_footer_branch
      %16 = sbr.rel target = $region3
    $region8: #{tpu_custom_call.1} parent=1 // loop_exit
      _
    %860 = vsyncpa [#allocation3], 1
    %s861 = scalar_lea.sflag [#allocation3], 1
    %862 = vsyncpa %s861, 1

</llo_original>
